<compile_context>
chip_gen: v6e
topology: v6e:2x2x1
jax: 0.10.0
libtpu: 0.0.40
codegen_flags: <defaults>
</compile_context>

<pallas_src>
import functools

import jax
import jax.numpy as jnp
from jax.experimental import pallas as pl
from jax.experimental.pallas import tpu as pltpu

_MIB = 1024 * 1024


def _round_up(x, m):
    return ((x + m - 1) // m) * m


def _tpu_hw():
    """Best-effort (VMEM capacity, TensorCores per chip); safe defaults."""
    vmem_cap = 64 * _MIB          # conservative (v7x); v5e/v6e have 128 MiB
    num_cores = 1
    try:
        info = pltpu.get_tpu_info()
        vmem_cap = int(getattr(info, "vmem_capacity_bytes", vmem_cap))
        num_cores = int(getattr(info, "num_cores",
                                getattr(info, "tensorcores_per_chip", num_cores)))
    except Exception:
        pass
    try:
        num_cores = max(num_cores, int(getattr(jax.devices()[0], "num_cores", 1)))
    except Exception:
        pass
    return vmem_cap, num_cores


def ffn_swiglu_kernel(beta_ref, x_ref, w1v_ref, w2_ref, o_ref, acc_ref, *, tn):
    # beta_ref: SMEM (1,) scalar
    # x_ref:    (tm, D)     token tile (native dtype)
    # w1v_ref:  (D, 2*tn)   interleaved [w1_block | v_block] slice for this h tile
    # w2_ref:   (tn, D)     slice of w2
    # o_ref:    (tm, D)     output tile (same block across the H axis)
    # acc_ref:  (tm, D)     f32 accumulator scratch
    h = pl.program_id(1)

    @pl.when(h == 0)
    def _():
        acc_ref[...] = jnp.zeros_like(acc_ref)

    x = x_ref[...]
    # One MXU pass produces both the w1(x) and v(x) halves for this hidden tile.
    ab = jnp.dot(x, w1v_ref[...], preferred_element_type=jnp.float32)  # (tm, 2*tn)
    a = ab[:, :tn]
    b = ab[:, tn:]

    beta = beta_ref[0].astype(jnp.float32)
    swish = a * jax.nn.sigmoid(a * beta)        # x * sigmoid(beta * x)  (EUP)
    gate = swish * b                            # per-(tm, tn) epilogue, hidden under MXU

    acc_ref[...] += jnp.dot(gate.astype(w2_ref.dtype), w2_ref[...],
                            preferred_element_type=jnp.float32)

    @pl.when(h == pl.num_programs(1) - 1)
    def _():
        o_ref[...] = acc_ref[...].astype(o_ref.dtype)


def ffn_swiglu(x, w1, v, w2, beta, *, tm=None, tn=None, compute_dtype=None):
    """SwiGLU FFN: w2( (x@w1) * sigmoid(beta*(x@w1)) * (x@v) ).

    x: [B, S, D]; w1, v: [D, H]; w2: [H, D]; beta: [1].
    """
    B, S, D = x.shape
    H = w1.shape[1]
    M = B * S

    if compute_dtype is not None:
        # e.g. jnp.bfloat16 on v5e: halves weight HBM traffic, doubles MXU rate.
        x = x.astype(compute_dtype)
        w1 = w1.astype(compute_dtype)
        v = v.astype(compute_dtype)
        w2 = w2.astype(compute_dtype)

    itemsize = jnp.dtype(x.dtype).itemsize
    w_itemsize = jnp.dtype(w1.dtype).itemsize
    out_itemsize = itemsize
    sub = {4: 8, 2: 16, 1: 32}[itemsize]   # sublane packing of the activation dtype

    vmem_cap, num_cores = _tpu_hw()
    budget = max(vmem_cap - 12 * _MIB, 24 * _MIB)   # working-set budget with headroom

    # ---- hidden (reduction) tile -------------------------------------------
    if tn is None:
        if 3 * D * H * w_itemsize <= budget // 2:
            tn = H                           # full weight residency: DMA'd exactly once
        else:
            max_tn = budget // (12 * D * w_itemsize)     # half budget, 2x-buffered slices
            target = int(min(512, max(128, (max_tn // 128) * 128)))
            tn = H
            for cand in range(target, 127, -128):
                if H % cand == 0:
                    tn = cand
                    break
    assert H % tn == 0, "hidden width must be divisible by the H tile"
    nH = H // tn

    # ---- token (parallel) tile ---------------------------------------------
    if tm is None:
        weight_bytes = 2 * 3 * tn * D * w_itemsize             # 2x-buffered weight slices
        per_row = D * (2 * itemsize + 2 * out_itemsize + 4)    # x/out 2x-buffered + f32 acc
        tm = int(max(sub, min(1024, (budget - weight_bytes) // per_row)))
        tm = (tm // sub) * sub
        if tm >= 128:
            tm = (tm // 128) * 128          # MXU-friendly
    tm = min(tm, _round_up(M, sub))
    # Keep >= 2 token tiles when the chip has 2 TensorCores (megacore sharding).
    if num_cores >= 2 and M > sub and _round_up(M, tm) // tm < 2:
        tm = _round_up((M + 1) // 2, sub)
    # Prefer a tile that divides M exactly (avoids the host-side pad copy of x).
    if M > tm and M % tm != 0:
        for cand in range(tm, max(tm // 2, sub) - 1, -sub):
            if M % cand == 0:
                tm = cand
                break
    tm = max(tm, sub)

    Mp = _round_up(M, tm)
    x2d = x.reshape(M, D)
    if Mp != M:
        x2d = jnp.pad(x2d, ((0, Mp - M), (0, 0)))   # padded rows give gate=0, sliced off

    # Interleave [w1 | v] per hidden tile so one contiguous DMA + one MXU pass
    # covers both projections.
    w1v = jnp.concatenate([w1.reshape(D, nH, tn), v.reshape(D, nH, tn)],
                          axis=2).reshape(D, 2 * H)

    grid = (Mp // tm, nH)

    def _serp(i, h):
        # Serpentine hidden order: weight block index is unchanged across the
        # i -> i+1 boundary (saves a redundant weight-slice fetch per token tile).
        if nH == 1:
            return 0
        r = i % 2
        return h * (1 - r) + (nH - 1 - h) * r

    n_token_tiles = Mp // tm
    weight_reads = 3 * D * H * w_itemsize * (1 if nH == 1 else n_token_tiles)
    cost = pl.CostEstimate(
        flops=int(6 * Mp * D * H),                   # three matmuls
        transcendentals=int(Mp * H),                 # sigmoid
        bytes_accessed=int(Mp * D * itemsize         # x read
                           + Mp * D * out_itemsize   # output write
                           + weight_reads),          # weight (re-)streams
    )

    work = (2 * tm * D * itemsize            # x tiles, double-buffered
            + 2 * tm * D * out_itemsize      # out tiles, double-buffered
            + 2 * 3 * tn * D * w_itemsize    # w1v + w2 slices, double-buffered
            + tm * D * 4)                    # f32 accumulator scratch
    vmem_limit = max(int(work) + 4 * _MIB, 32 * _MIB)
    vmem_limit = min(vmem_limit, max(vmem_cap - 8 * _MIB, 16 * _MIB))

    out2d = pl.pallas_call(
        functools.partial(ffn_swiglu_kernel, tn=tn),
        out_shape=jax.ShapeDtypeStruct((Mp, D), x.dtype),
        grid=grid,
        in_specs=[
            pl.BlockSpec(memory_space=pltpu.MemorySpace.SMEM),         # beta (scalar)
            pl.BlockSpec((tm, D), lambda i, h: (i, 0)),                # x tile
            pl.BlockSpec((D, 2 * tn), lambda i, h: (0, _serp(i, h))),  # [w1|v] slice
            pl.BlockSpec((tn, D), lambda i, h: (_serp(i, h), 0)),      # w2 slice
        ],
        out_specs=pl.BlockSpec((tm, D), lambda i, h: (i, 0)),
        scratch_shapes=[pltpu.VMEM((tm, D), jnp.float32)],
        compiler_params=pltpu.CompilerParams(
            dimension_semantics=("parallel", "arbitrary"),
            vmem_limit_bytes=int(vmem_limit)),
        cost_estimate=cost,
    )(beta, x2d, w1v, w2)

    return out2d[:M].reshape(B, S, D)


def ffn_swiglu_ref(x, w1, v, w2, beta):
    a = jnp.einsum("bsd,dh->bsh", x, w1)
    b = jnp.einsum("bsd,dh->bsh", x, v)
    swish = a * jax.nn.sigmoid(a * beta[0])
    gate = swish * b
    return jnp.einsum("bsh,hd->bsd", gate, w2)


if __name__ == "__main__":
    # Small shapes consistent with the module: d_model=128, hidden=4*d_model=512
    B, S, D = 2, 8, 128
    H = 4 * D

    key = jax.random.PRNGKey(0)
    kx, k1, k2, k3 = jax.random.split(key, 4)

    x = jax.random.normal(kx, (B, S, D), dtype=jnp.float32)
    # Deterministic "Linear" weights, stored pre-transposed as [in, out].
    w1 = jax.random.normal(k1, (D, H), dtype=jnp.float32) * 0.02
    v = jax.random.normal(k2, (D, H), dtype=jnp.float32) * 0.02
    w2 = jax.random.normal(k3, (H, D), dtype=jnp.float32) * 0.02
    beta = jnp.ones((1,), dtype=jnp.float32)   # nn.Parameter(torch.ones(1))

    out = jax.block_until_ready(ffn_swiglu(x, w1, v, w2, beta))
    ref = jax.block_until_ready(ffn_swiglu_ref(x, w1, v, w2, beta))

    assert out.shape == (B, S, D)
    assert jnp.allclose(out, ref, atol=1e-4, rtol=1e-4), "mismatch vs reference"
    print("KERNEL_OK")
</pallas_src>

<mosaic_0001>
module attributes {stable_mosaic.version = 11 : i64} {
  func.func @ffn_swiglu_kernel(%arg0: i32, %arg1: i32, %arg2: memref<1xf32, #tpu.memory_space<smem>>, %arg3: memref<16x128xf32, #tpu.memory_space<vmem>>, %arg4: memref<128x1024xf32, #tpu.memory_space<vmem>>, %arg5: memref<512x128xf32, #tpu.memory_space<vmem>>, %arg6: memref<16x128xf32, #tpu.memory_space<vmem>>, %arg7: memref<16x128xf32, #tpu.memory_space<vmem>>) attributes {dimension_semantics = [#tpu.dimension_semantics<parallel>, #tpu.dimension_semantics<arbitrary>], iteration_bounds = array<i64: 1, 1>, scalar_prefetch = 0 : i64, scratch_operands = 1 : i64, tpu.core_type = #tpu.core_type<tc>, window_params = [{transform_indices = @transform_0, window_bounds = array<i64: 1>}, {transform_indices = @transform_1, window_bounds = array<i64: 16, 128>}, {pipeline_mode = #tpu.pipeline_mode<synchronous>, transform_indices = @transform_2, window_bounds = array<i64: 128, 1024>}, {pipeline_mode = #tpu.pipeline_mode<synchronous>, transform_indices = @transform_3, window_bounds = array<i64: 512, 128>}, {transform_indices = @transform_4, window_bounds = array<i64: 16, 128>}]} {
    %c0_i32 = arith.constant 0 : i32
    %0 = arith.cmpi eq, %arg1, %c0_i32 : i32
    %1 = arith.extui %0 : i1 to i32
    %c0_i32_0 = arith.constant 0 : i32
    %2 = arith.cmpi ne, %1, %c0_i32_0 : i32
    scf.if %2 {
      %cst_15 = arith.constant 0.000000e+00 : f32
      %26 = vector.broadcast %cst_15 : f32 to vector<16x128xf32>
      %c0_16 = arith.constant 0 : index
      %c0_17 = arith.constant 0 : index
      %27 = vector.load %arg7[%c0_16, %c0_17] : memref<16x128xf32, #tpu.memory_space<vmem>>, vector<16x128xf32>
      tpu.vector_store %arg7[%c0_16, %c0_17], %26 {strides = array<i32>} : memref<16x128xf32, #tpu.memory_space<vmem>>, vector<16x128xf32>,
    } else {
    }
    %c0 = arith.constant 0 : index
    %c0_1 = arith.constant 0 : index
    %3 = vector.load %arg3[%c0, %c0_1] : memref<16x128xf32, #tpu.memory_space<vmem>>, vector<16x128xf32>
    %c0_2 = arith.constant 0 : index
    %c0_3 = arith.constant 0 : index
    %4 = vector.load %arg4[%c0_2, %c0_3] : memref<128x1024xf32, #tpu.memory_space<vmem>>, vector<128x1024xf32>
    %cst = arith.constant dense<0.000000e+00> : vector<16x1024xf32>
    %5 = tpu.matmul %3, %4, %cst {dimension_numbers = #tpu.dot_dimension_numbers<[1], [0], [0], [1], [0, 0, 1, 1], [], []>} : vector<16x128xf32>, vector<128x1024xf32>, vector<16x1024xf32> -> vector<16x1024xf32>
    %6 = vector.extract_strided_slice %5 {offsets = [0, 0], sizes = [16, 512], strides = [1, 1]} : vector<16x1024xf32> to vector<16x512xf32>
    %7 = vector.extract_strided_slice %5 {offsets = [0, 512], sizes = [16, 512], strides = [1, 1]} : vector<16x1024xf32> to vector<16x512xf32>
    %c0_4 = arith.constant 0 : index
    %8 = memref.load %arg2[%c0_4] : memref<1xf32, #tpu.memory_space<smem>>
    %9 = vector.broadcast %8 : f32 to vector<16x512xf32>
    %10 = arith.mulf %6, %9 : vector<16x512xf32>
    %11 = arith.negf %10 : vector<16x512xf32>
    %12 = math.exp %11 : vector<16x512xf32>
    %cst_5 = arith.constant 1.000000e+00 : f32
    %13 = vector.broadcast %cst_5 : f32 to vector<16x512xf32>
    %14 = arith.addf %13, %12 : vector<16x512xf32>
    %15 = arith.divf %13, %14 : vector<16x512xf32>
    %16 = arith.mulf %6, %15 : vector<16x512xf32>
    %17 = arith.mulf %16, %7 : vector<16x512xf32>
    %c0_6 = arith.constant 0 : index
    %c0_7 = arith.constant 0 : index
    %18 = vector.load %arg7[%c0_6, %c0_7] : memref<16x128xf32, #tpu.memory_space<vmem>>, vector<16x128xf32>
    %c0_8 = arith.constant 0 : index
    %c0_9 = arith.constant 0 : index
    %19 = vector.load %arg5[%c0_8, %c0_9] : memref<512x128xf32, #tpu.memory_space<vmem>>, vector<512x128xf32>
    %cst_10 = arith.constant dense<0.000000e+00> : vector<16x128xf32>
    %20 = tpu.matmul %17, %19, %cst_10 {dimension_numbers = #tpu.dot_dimension_numbers<[1], [0], [0], [1], [0, 0, 1, 1], [], []>} : vector<16x512xf32>, vector<512x128xf32>, vector<16x128xf32> -> vector<16x128xf32>
    %21 = arith.addf %18, %20 : vector<16x128xf32>
    %c0_11 = arith.constant 0 : index
    %c0_12 = arith.constant 0 : index
    %22 = vector.load %arg7[%c0_11, %c0_12] : memref<16x128xf32, #tpu.memory_space<vmem>>, vector<16x128xf32>
    tpu.vector_store %arg7[%c0_11, %c0_12], %21 {strides = array<i32>} : memref<16x128xf32, #tpu.memory_space<vmem>>, vector<16x128xf32>,
    %c0_i32_13 = arith.constant 0 : i32
    %23 = arith.cmpi eq, %arg1, %c0_i32_13 : i32
    %24 = arith.extui %23 : i1 to i32
    %c0_i32_14 = arith.constant 0 : i32
    %25 = arith.cmpi ne, %24, %c0_i32_14 : i32
    scf.if %25 {
      %c0_15 = arith.constant 0 : index
      %c0_16 = arith.constant 0 : index
      %26 = vector.load %arg7[%c0_15, %c0_16] : memref<16x128xf32, #tpu.memory_space<vmem>>, vector<16x128xf32>
      %c0_17 = arith.constant 0 : index
      %c0_18 = arith.constant 0 : index
      %27 = vector.load %arg6[%c0_17, %c0_18] : memref<16x128xf32, #tpu.memory_space<vmem>>, vector<16x128xf32>
      tpu.vector_store %arg6[%c0_17, %c0_18], %26 {strides = array<i32>} : memref<16x128xf32, #tpu.memory_space<vmem>>, vector<16x128xf32>,
    } else {
    }
    return
  }
  func.func @transform_0(%arg0: i32, %arg1: i32) -> i32 {
    %c0_i32 = arith.constant 0 : i32
    %c0_i32_0 = arith.constant 0 : i32
    return %c0_i32 : i32
  }
  func.func @transform_1(%arg0: i32, %arg1: i32) -> (i32, i32) {
    %c0_i32 = arith.constant 0 : i32
    %c0_i32_0 = arith.constant 0 : i32
    return %arg0, %c0_i32 : i32, i32
  }
  func.func @transform_2(%arg0: i32, %arg1: i32) -> (i32, i32) {
    %c0_i32 = arith.constant 0 : i32
    %c0_i32_0 = arith.constant 0 : i32
    %c0_i32_1 = arith.constant 0 : i32
    return %c0_i32, %c0_i32_0 : i32, i32
  }
  func.func @transform_3(%arg0: i32, %arg1: i32) -> (i32, i32) {
    %c0_i32 = arith.constant 0 : i32
    %c0_i32_0 = arith.constant 0 : i32
    %c0_i32_1 = arith.constant 0 : i32
    return %c0_i32, %c0_i32_0 : i32, i32
  }
  func.func @transform_4(%arg0: i32, %arg1: i32) -> (i32, i32) {
    %c0_i32 = arith.constant 0 : i32
    %c0_i32_0 = arith.constant 0 : i32
    return %arg0, %c0_i32 : i32, i32
  }
}

</mosaic_0001>

<llo_original>
// kernel: tpu_custom_call.1
$region0: #{tpu_custom_call.1}
  #allocation0 [shape = 'u32[]', space=smem, size = 0x4, offset = 0x4, fixed_abs, tag = 'smem constant byte address 0x4 - core index']
  #allocation1 [shape = 'u32[144,128]{1,0:T(1,128)}', space=vmem, size = 0x12000, scoped, tag = 'internal scratch']
  #allocation2 [shape = 'f32[16,128]{1,0:T(8,128)}', space=vmem, size = 0x2000, scoped, tag = 'scratch operand']
  #allocation3 [shape = 'f32[1]{0:T(128)S(6)}', space=smem, size = 0x200, scoped, tag = 'scoped memory for tpu_custom_call.1']
  %s0 = inlined_call_operand.<no memory space> [shape: f32[1], index: 0, kind: input, shape index: {}]
  %s1 = inlined_call_operand.hbm [shape: f32[16,128], index: 1, kind: input, shape index: {}]
  %s2 = inlined_call_operand.hbm [shape: f32[128,1024], index: 2, kind: input, shape index: {}]
  %s3 = inlined_call_operand.hbm [shape: f32[512,128], index: 3, kind: input, shape index: {}]
  %s4 = inlined_call_operand.hbm [shape: f32[16,128], index: 4, kind: output, shape index: {}]
  %s5 = sld [smem:[#allocation0]]
  $region46: #{tpu_custom_call.1} parent=0
    _
  %s7 = ssub.s32 1, %s5
  %s8 = scalar_select 0, %s7, %s5
  %9 = sst [smem:[#allocation3]] %s0
  $region1: #{tpu_custom_call.1} parent=0
    #allocation4 [shape = 'u8[8192]{0}', space=vmem, size = 0x2000, scoped, tag = 'input window, operand 1, single buffered']
    #allocation5 [shape = 's32[1]{0}', space=sflag, size = 0x4, scoped, tag = 'scoped memory for tpu_custom_call.1']
    #allocation6 [shape = 's32[1]{0}', space=sflag, size = 0x4, scoped, tag = 'scoped memory for tpu_custom_call.1']
    #allocation7 [shape = 'u8[524288]{0}', space=vmem, size = 0x80000, scoped, tag = 'input window, operand 2, single buffered']
    #allocation8 [shape = 's32[1]{0}', space=sflag, size = 0x4, scoped, tag = 'scoped memory for tpu_custom_call.1']
    #allocation9 [shape = 'u8[262144]{0}', space=vmem, size = 0x40000, scoped, tag = 'input window, operand 3, single buffered']
    #allocation10 [shape = 'u8[8192]{0}', space=vmem, size = 0x2000, scoped, tag = 'output window, operand 0, single buffered']
    %10 = vsyncpa [#allocation5], 0
    %11 = vsyncpa [#allocation8], 0
    %12 = vsyncpa [#allocation6], 0
    // Predicated region
    $region2: #{tpu_custom_call.1} parent=1 // pred_check
      _
    $region3: #{tpu_custom_call.1} parent=1 // pred_check_branch
      %14 = sbr.rel (0) target = $region5
    $region4: #{tpu_custom_call.1} parent=1 // pred_region
      _
    $region5: #{tpu_custom_call.1} parent=1 // pred_fallthru
      _
    // Predicated region
    $region6: #{tpu_custom_call.1} parent=1 // pred_check
      _
    $region7: #{tpu_custom_call.1} parent=1 // pred_check_branch
      %16 = sbr.rel (0) target = $region9
    $region8: #{tpu_custom_call.1} parent=1 // pred_region
      %s18 = ssub.s32 256, 256
      %19 = vsyncadd [#allocation5], %s18
      %s20 = sshll.u32 [#allocation4], 4
      %s21 = int_to_ptr.vmem [resolvable:$true] %s20
      %26 = dma.hbm_to_vmem [thread:$0]  %s1, 256, %s21, [#allocation5], 128, 128, 8
    $region9: #{tpu_custom_call.1} parent=1 // pred_fallthru
      _
    // Predicated region
    $region10: #{tpu_custom_call.1} parent=1 // pred_check
      _
    $region11: #{tpu_custom_call.1} parent=1 // pred_check_branch
      %28 = sbr.rel (0) target = $region13
    $region12: #{tpu_custom_call.1} parent=1 // pred_region
      %s30 = ssub.s32 16384, 16384
      %31 = vsyncadd [#allocation8], %s30
      %s32 = sshll.u32 [#allocation7], 4
      %s33 = int_to_ptr.vmem [resolvable:$true] %s32
      %38 = dma.hbm_to_vmem [thread:$0]  %s2, 16384, %s33, [#allocation8], 1024, 1024, 64
    $region13: #{tpu_custom_call.1} parent=1 // pred_fallthru
      _
    // Predicated region
    $region14: #{tpu_custom_call.1} parent=1 // pred_check
      _
    $region15: #{tpu_custom_call.1} parent=1 // pred_check_branch
      %40 = sbr.rel (0) target = $region17
    $region16: #{tpu_custom_call.1} parent=1 // pred_region
      %s42 = ssub.s32 8192, 8192
      %43 = vsyncadd [#allocation8], %s42
      %s44 = sshll.u32 [#allocation9], 4
      %s45 = int_to_ptr.vmem [resolvable:$true] %s44
      %50 = dma.hbm_to_vmem [thread:$0]  %s3, 8192, %s45, [#allocation8], 128, 128, 8
    $region17: #{tpu_custom_call.1} parent=1 // pred_fallthru
      _
    // Predicated region
    $region18: #{tpu_custom_call.1} parent=1 // pred_check
      _
    $region19: #{tpu_custom_call.1} parent=1 // pred_check_branch
      %52 = sbr.rel (0) target = $region21
    $region20: #{tpu_custom_call.1} parent=1 // pred_region
      %53 = dma.done [#allocation5], 256
    $region21: #{tpu_custom_call.1} parent=1 // pred_fallthru
      _
    // Predicated region
    $region22: #{tpu_custom_call.1} parent=1 // pred_check
      _
    $region23: #{tpu_custom_call.1} parent=1 // pred_check_branch
      %55 = sbr.rel (0) target = $region25
    $region24: #{tpu_custom_call.1} parent=1 // pred_region
      %56 = dma.done [#allocation8], 16384
    $region25: #{tpu_custom_call.1} parent=1 // pred_fallthru
      _
    // Predicated region
    $region26: #{tpu_custom_call.1} parent=1 // pred_check
      _
    $region27: #{tpu_custom_call.1} parent=1 // pred_check_branch
      %58 = sbr.rel (0) target = $region29
    $region28: #{tpu_custom_call.1} parent=1 // pred_region
      %59 = dma.done [#allocation8], 8192
    $region29: #{tpu_custom_call.1} parent=1 // pred_fallthru
      _
    %p60 = scmp.eq.s32.totalorder 0, 0
    // Predicated region
    $region30: #{tpu_custom_call.1} parent=1 // pred_check
      %p61 = pneg %p60
    $region31: #{tpu_custom_call.1} parent=1 // pred_check_branch
      %63 = sbr.rel (%p61) target = $region33
    $region32: #{tpu_custom_call.1} parent=1 // pred_region
      %64 = vst [vmem:[#allocation2] sm:$0xff] 0.0
      %65 = vst [vmem:[#allocation2 + $0x8] sm:$0xff] 0.0
    $region33: #{tpu_custom_call.1} parent=1 // pred_fallthru
      _
    %v66 = vld [vmem:[#allocation4] sm:$0xff]
    %v67 = vld [vmem:[#allocation4 + $0x8] sm:$0xff]
    %v68 = vld [vmem:[#allocation7] sm:$0xff]
    %v69 = vld [vmem:[#allocation7 + $0x8] sm:$0xff]
    %v70 = vld [vmem:[#allocation7 + $0x10] sm:$0xff]
    %v71 = vld [vmem:[#allocation7 + $0x18] sm:$0xff]
    %v72 = vld [vmem:[#allocation7 + $0x20] sm:$0xff]
    %v73 = vld [vmem:[#allocation7 + $0x28] sm:$0xff]
    %v74 = vld [vmem:[#allocation7 + $0x30] sm:$0xff]
    %v75 = vld [vmem:[#allocation7 + $0x38] sm:$0xff]
    %v76 = vld [vmem:[#allocation7 + $0x40] sm:$0xff]
    %v77 = vld [vmem:[#allocation7 + $0x48] sm:$0xff]
    %v78 = vld [vmem:[#allocation7 + $0x50] sm:$0xff]
    %v79 = vld [vmem:[#allocation7 + $0x58] sm:$0xff]
    %v80 = vld [vmem:[#allocation7 + $0x60] sm:$0xff]
    %v81 = vld [vmem:[#allocation7 + $0x68] sm:$0xff]
    %v82 = vld [vmem:[#allocation7 + $0x70] sm:$0xff]
    %v83 = vld [vmem:[#allocation7 + $0x78] sm:$0xff]
    %v84 = vld [vmem:[#allocation7 + $0x80] sm:$0xff]
    %v85 = vld [vmem:[#allocation7 + $0x88] sm:$0xff]
    %v86 = vld [vmem:[#allocation7 + $0x90] sm:$0xff]
    %v87 = vld [vmem:[#allocation7 + $0x98] sm:$0xff]
    %v88 = vld [vmem:[#allocation7 + $0xa0] sm:$0xff]
    %v89 = vld [vmem:[#allocation7 + $0xa8] sm:$0xff]
    %v90 = vld [vmem:[#allocation7 + $0xb0] sm:$0xff]
    %v91 = vld [vmem:[#allocation7 + $0xb8] sm:$0xff]
    %v92 = vld [vmem:[#allocation7 + $0xc0] sm:$0xff]
    %v93 = vld [vmem:[#allocation7 + $0xc8] sm:$0xff]
    %v94 = vld [vmem:[#allocation7 + $0xd0] sm:$0xff]
    %v95 = vld [vmem:[#allocation7 + $0xd8] sm:$0xff]
    %v96 = vld [vmem:[#allocation7 + $0xe0] sm:$0xff]
    %v97 = vld [vmem:[#allocation7 + $0xe8] sm:$0xff]
    %v98 = vld [vmem:[#allocation7 + $0xf0] sm:$0xff]
    %v99 = vld [vmem:[#allocation7 + $0xf8] sm:$0xff]
    %v100 = vld [vmem:[#allocation7 + $0x100] sm:$0xff]
    %v101 = vld [vmem:[#allocation7 + $0x108] sm:$0xff]
    %v102 = vld [vmem:[#allocation7 + $0x110] sm:$0xff]
    %v103 = vld [vmem:[#allocation7 + $0x118] sm:$0xff]
    %v104 = vld [vmem:[#allocation7 + $0x120] sm:$0xff]
    %v105 = vld [vmem:[#allocation7 + $0x128] sm:$0xff]
    %v106 = vld [vmem:[#allocation7 + $0x130] sm:$0xff]
    %v107 = vld [vmem:[#allocation7 + $0x138] sm:$0xff]
    %v108 = vld [vmem:[#allocation7 + $0x140] sm:$0xff]
    %v109 = vld [vmem:[#allocation7 + $0x148] sm:$0xff]
    %v110 = vld [vmem:[#allocation7 + $0x150] sm:$0xff]
    %v111 = vld [vmem:[#allocation7 + $0x158] sm:$0xff]
    %v112 = vld [vmem:[#allocation7 + $0x160] sm:$0xff]
    %v113 = vld [vmem:[#allocation7 + $0x168] sm:$0xff]
    %v114 = vld [vmem:[#allocation7 + $0x170] sm:$0xff]
    %v115 = vld [vmem:[#allocation7 + $0x178] sm:$0xff]
    %v116 = vld [vmem:[#allocation7 + $0x180] sm:$0xff]
    %v117 = vld [vmem:[#allocation7 + $0x188] sm:$0xff]
    %v118 = vld [vmem:[#allocation7 + $0x190] sm:$0xff]
    %v119 = vld [vmem:[#allocation7 + $0x198] sm:$0xff]
    %v120 = vld [vmem:[#allocation7 + $0x1a0] sm:$0xff]
    %v121 = vld [vmem:[#allocation7 + $0x1a8] sm:$0xff]
    %v122 = vld [vmem:[#allocation7 + $0x1b0] sm:$0xff]
    %v123 = vld [vmem:[#allocation7 + $0x1b8] sm:$0xff]
    %v124 = vld [vmem:[#allocation7 + $0x1c0] sm:$0xff]
    %v125 = vld [vmem:[#allocation7 + $0x1c8] sm:$0xff]
    %v126 = vld [vmem:[#allocation7 + $0x1d0] sm:$0xff]
    %v127 = vld [vmem:[#allocation7 + $0x1d8] sm:$0xff]
    %v128 = vld [vmem:[#allocation7 + $0x1e0] sm:$0xff]
    %v129 = vld [vmem:[#allocation7 + $0x1e8] sm:$0xff]
    %v130 = vld [vmem:[#allocation7 + $0x1f0] sm:$0xff]
    %v131 = vld [vmem:[#allocation7 + $0x1f8] sm:$0xff]
    %v132 = vld [vmem:[#allocation7 + $0x200] sm:$0xff]
    %v133 = vld [vmem:[#allocation7 + $0x208] sm:$0xff]
    %v134 = vld [vmem:[#allocation7 + $0x210] sm:$0xff]
    %v135 = vld [vmem:[#allocation7 + $0x218] sm:$0xff]
    %v136 = vld [vmem:[#allocation7 + $0x220] sm:$0xff]
    %v137 = vld [vmem:[#allocation7 + $0x228] sm:$0xff]
    %v138 = vld [vmem:[#allocation7 + $0x230] sm:$0xff]
    %v139 = vld [vmem:[#allocation7 + $0x238] sm:$0xff]
    %v140 = vld [vmem:[#allocation7 + $0x240] sm:$0xff]
    %v141 = vld [vmem:[#allocation7 + $0x248] sm:$0xff]
    %v142 = vld [vmem:[#allocation7 + $0x250] sm:$0xff]
    %v143 = vld [vmem:[#allocation7 + $0x258] sm:$0xff]
    %v144 = vld [vmem:[#allocation7 + $0x260] sm:$0xff]
    %v145 = vld [vmem:[#allocation7 + $0x268] sm:$0xff]
    %v146 = vld [vmem:[#allocation7 + $0x270] sm:$0xff]
    %v147 = vld [vmem:[#allocation7 + $0x278] sm:$0xff]
    %v148 = vld [vmem:[#allocation7 + $0x280] sm:$0xff]
    %v149 = vld [vmem:[#allocation7 + $0x288] sm:$0xff]
    %v150 = vld [vmem:[#allocation7 + $0x290] sm:$0xff]
    %v151 = vld [vmem:[#allocation7 + $0x298] sm:$0xff]
    %v152 = vld [vmem:[#allocation7 + $0x2a0] sm:$0xff]
    %v153 = vld [vmem:[#allocation7 + $0x2a8] sm:$0xff]
    %v154 = vld [vmem:[#allocation7 + $0x2b0] sm:$0xff]
    %v155 = vld [vmem:[#allocation7 + $0x2b8] sm:$0xff]
    %v156 = vld [vmem:[#allocation7 + $0x2c0] sm:$0xff]
    %v157 = vld [vmem:[#allocation7 + $0x2c8] sm:$0xff]
    %v158 = vld [vmem:[#allocation7 + $0x2d0] sm:$0xff]
    %v159 = vld [vmem:[#allocation7 + $0x2d8] sm:$0xff]
    %v160 = vld [vmem:[#allocation7 + $0x2e0] sm:$0xff]
    %v161 = vld [vmem:[#allocation7 + $0x2e8] sm:$0xff]
    %v162 = vld [vmem:[#allocation7 + $0x2f0] sm:$0xff]
    %v163 = vld [vmem:[#allocation7 + $0x2f8] sm:$0xff]
    %v164 = vld [vmem:[#allocation7 + $0x300] sm:$0xff]
    %v165 = vld [vmem:[#allocation7 + $0x308] sm:$0xff]
    %v166 = vld [vmem:[#allocation7 + $0x310] sm:$0xff]
    %v167 = vld [vmem:[#allocation7 + $0x318] sm:$0xff]
    %v168 = vld [vmem:[#allocation7 + $0x320] sm:$0xff]
    %v169 = vld [vmem:[#allocation7 + $0x328] sm:$0xff]
    %v170 = vld [vmem:[#allocation7 + $0x330] sm:$0xff]
    %v171 = vld [vmem:[#allocation7 + $0x338] sm:$0xff]
    %v172 = vld [vmem:[#allocation7 + $0x340] sm:$0xff]
    %v173 = vld [vmem:[#allocation7 + $0x348] sm:$0xff]
    %v174 = vld [vmem:[#allocation7 + $0x350] sm:$0xff]
    %v175 = vld [vmem:[#allocation7 + $0x358] sm:$0xff]
    %v176 = vld [vmem:[#allocation7 + $0x360] sm:$0xff]
    %v177 = vld [vmem:[#allocation7 + $0x368] sm:$0xff]
    %v178 = vld [vmem:[#allocation7 + $0x370] sm:$0xff]
    %v179 = vld [vmem:[#allocation7 + $0x378] sm:$0xff]
    %v180 = vld [vmem:[#allocation7 + $0x380] sm:$0xff]
    %v181 = vld [vmem:[#allocation7 + $0x388] sm:$0xff]
    %v182 = vld [vmem:[#allocation7 + $0x390] sm:$0xff]
    %v183 = vld [vmem:[#allocation7 + $0x398] sm:$0xff]
    %v184 = vld [vmem:[#allocation7 + $0x3a0] sm:$0xff]
    %v185 = vld [vmem:[#allocation7 + $0x3a8] sm:$0xff]
    %v186 = vld [vmem:[#allocation7 + $0x3b0] sm:$0xff]
    %v187 = vld [vmem:[#allocation7 + $0x3b8] sm:$0xff]
    %v188 = vld [vmem:[#allocation7 + $0x3c0] sm:$0xff]
    %v189 = vld [vmem:[#allocation7 + $0x3c8] sm:$0xff]
    %v190 = vld [vmem:[#allocation7 + $0x3d0] sm:$0xff]
    %v191 = vld [vmem:[#allocation7 + $0x3d8] sm:$0xff]
    %v192 = vld [vmem:[#allocation7 + $0x3e0] sm:$0xff]
    %v193 = vld [vmem:[#allocation7 + $0x3e8] sm:$0xff]
    %v194 = vld [vmem:[#allocation7 + $0x3f0] sm:$0xff]
    %v195 = vld [vmem:[#allocation7 + $0x3f8] sm:$0xff]
    %196 = vmatprep.subr.mxu0 %v189
    %197 = vmatpush1.msra.mxu0 %v188
    %198 = vmatprep.subr.mxu0 %v181
    %199 = vmatpush1.msra.mxu0 %v180
    %200 = vmatprep.subr.mxu0 %v173
    %201 = vmatpush1.msra.mxu0 %v172
    %202 = vmatprep.subr.mxu0 %v165
    %203 = vmatpush1.msra.mxu0 %v164
    %204 = vmatprep.subr.mxu0 %v157
    %205 = vmatpush1.msra.mxu0 %v156
    %206 = vmatprep.subr.mxu0 %v149
    %207 = vmatpush1.msra.mxu0 %v148
    %208 = vmatprep.subr.mxu0 %v141
    %209 = vmatpush1.msra.mxu0 %v140
    %210 = vmatprep.subr.mxu0 %v133
    %211 = vmatpush1.msra.mxu0 %v132
    %212 = vmatprep.subr.mxu0 %v125
    %213 = vmatpush1.msra.mxu0 %v124
    %214 = vmatprep.subr.mxu0 %v117
    %215 = vmatpush1.msra.mxu0 %v116
    %216 = vmatprep.subr.mxu0 %v109
    %217 = vmatpush1.msra.mxu0 %v108
    %218 = vmatprep.subr.mxu0 %v101
    %219 = vmatpush1.msra.mxu0 %v100
    %220 = vmatprep.subr.mxu0 %v93
    %221 = vmatpush1.msra.mxu0 %v92
    %222 = vmatprep.subr.mxu0 %v85
    %223 = vmatpush1.msra.mxu0 %v84
    %224 = vmatprep.subr.mxu0 %v77
    %225 = vmatpush1.msra.mxu0 %v76
    %226 = vmatprep.subr.mxu0 %v69
    %227 = vmatpush1.msra.mxu0 %v68
    %228 = vmatprep.subr.mxu0 0.0
    %229 = vmatpush2.msra.mxu0 0.0
    %230 = vmatprep.subr.mxu0 0.0
    %231 = vmatpush2.msra.mxu0 0.0
    %232 = vmatprep.subr.mxu0 0.0
    %233 = vmatpush2.msra.mxu0 0.0
    %234 = vmatprep.subr.mxu0 0.0
    %235 = vmatpush2.msra.mxu0 0.0
    %236 = vmatprep.subr.mxu0 0.0
    %237 = vmatpush2.msra.mxu0 0.0
    %238 = vmatprep.subr.mxu0 0.0
    %239 = vmatpush2.msra.mxu0 0.0
    %240 = vmatprep.subr.mxu0 0.0
    %241 = vmatpush2.msra.mxu0 0.0
    %242 = vmatprep.subr.mxu0 0.0
    %243 = vmatpush2.msra.mxu0 0.0
    %244 = vmatprep.subr.mxu0 0.0
    %245 = vmatpush2.msra.mxu0 0.0
    %246 = vmatprep.subr.mxu0 0.0
    %247 = vmatpush2.msra.mxu0 0.0
    %248 = vmatprep.subr.mxu0 0.0
    %249 = vmatpush2.msra.mxu0 0.0
    %250 = vmatprep.subr.mxu0 0.0
    %251 = vmatpush2.msra.mxu0 0.0
    %252 = vmatprep.subr.mxu0 0.0
    %253 = vmatpush2.msra.mxu0 0.0
    %254 = vmatprep.subr.mxu0 0.0
    %255 = vmatpush2.msra.mxu0 0.0
    %256 = vmatprep.subr.mxu0 0.0
    %257 = vmatpush2.msra.mxu0 0.0
    %258 = vmatprep.subr.mxu0 0.0
    %259 = vmatpush2.msra.mxu0 0.0
    %260 = vmatprep.mubr.f32.mxu0 0.0
    %261 = vmatmul.mubr.f32.gmra.mxu0 %v66
    %v262 = vpop.f32.mrf.mxu0
    %v263 = vadd.f32 0.0, %v262
    %v264 = vpop.f32.mrf.mxu0
    %v265 = vadd.f32 0.0, %v264
    %266 = vmatprep.mubr.f32.mxu0 0.0
    %267 = vmatmul.mubr.f32.gmra.mxu0 %v67
    %v268 = vpop.f32.mrf.mxu0
    %v269 = vadd.f32 0.0, %v268
    %v270 = vpop.f32.mrf.mxu0
    %v271 = vadd.f32 0.0, %v270
    %272 = vdwg.mxu0
    %273 = vmatprep.subr.mxu0 %v191
    %274 = vmatpush1.msra.mxu0 %v190
    %275 = vmatprep.subr.mxu0 %v183
    %276 = vmatpush1.msra.mxu0 %v182
    %277 = vmatprep.subr.mxu0 %v175
    %278 = vmatpush1.msra.mxu0 %v174
    %279 = vmatprep.subr.mxu0 %v167
    %280 = vmatpush1.msra.mxu0 %v166
    %281 = vmatprep.subr.mxu0 %v159
    %282 = vmatpush1.msra.mxu0 %v158
    %283 = vmatprep.subr.mxu0 %v151
    %284 = vmatpush1.msra.mxu0 %v150
    %285 = vmatprep.subr.mxu0 %v143
    %286 = vmatpush1.msra.mxu0 %v142
    %287 = vmatprep.subr.mxu0 %v135
    %288 = vmatpush1.msra.mxu0 %v134
    %289 = vmatprep.subr.mxu0 %v127
    %290 = vmatpush1.msra.mxu0 %v126
    %291 = vmatprep.subr.mxu0 %v119
    %292 = vmatpush1.msra.mxu0 %v118
    %293 = vmatprep.subr.mxu0 %v111
    %294 = vmatpush1.msra.mxu0 %v110
    %295 = vmatprep.subr.mxu0 %v103
    %296 = vmatpush1.msra.mxu0 %v102
    %297 = vmatprep.subr.mxu0 %v95
    %298 = vmatpush1.msra.mxu0 %v94
    %299 = vmatprep.subr.mxu0 %v87
    %300 = vmatpush1.msra.mxu0 %v86
    %301 = vmatprep.subr.mxu0 %v79
    %302 = vmatpush1.msra.mxu0 %v78
    %303 = vmatprep.subr.mxu0 %v71
    %304 = vmatpush1.msra.mxu0 %v70
    %305 = vmatprep.subr.mxu0 0.0
    %306 = vmatpush2.msra.mxu0 0.0
    %307 = vmatprep.subr.mxu0 0.0
    %308 = vmatpush2.msra.mxu0 0.0
    %309 = vmatprep.subr.mxu0 0.0
    %310 = vmatpush2.msra.mxu0 0.0
    %311 = vmatprep.subr.mxu0 0.0
    %312 = vmatpush2.msra.mxu0 0.0
    %313 = vmatprep.subr.mxu0 0.0
    %314 = vmatpush2.msra.mxu0 0.0
    %315 = vmatprep.subr.mxu0 0.0
    %316 = vmatpush2.msra.mxu0 0.0
    %317 = vmatprep.subr.mxu0 0.0
    %318 = vmatpush2.msra.mxu0 0.0
    %319 = vmatprep.subr.mxu0 0.0
    %320 = vmatpush2.msra.mxu0 0.0
    %321 = vmatprep.subr.mxu0 0.0
    %322 = vmatpush2.msra.mxu0 0.0
    %323 = vmatprep.subr.mxu0 0.0
    %324 = vmatpush2.msra.mxu0 0.0
    %325 = vmatprep.subr.mxu0 0.0
    %326 = vmatpush2.msra.mxu0 0.0
    %327 = vmatprep.subr.mxu0 0.0
    %328 = vmatpush2.msra.mxu0 0.0
    %329 = vmatprep.subr.mxu0 0.0
    %330 = vmatpush2.msra.mxu0 0.0
    %331 = vmatprep.subr.mxu0 0.0
    %332 = vmatpush2.msra.mxu0 0.0
    %333 = vmatprep.subr.mxu0 0.0
    %334 = vmatpush2.msra.mxu0 0.0
    %335 = vmatprep.subr.mxu0 0.0
    %336 = vmatpush2.msra.mxu0 0.0
    %337 = vmatprep.mubr.f32.mxu0 0.0
    %338 = vmatmul.mubr.f32.gmra.mxu0 %v66
    %v339 = vpop.f32.mrf.mxu0
    %v340 = vadd.f32 0.0, %v339
    %v341 = vpop.f32.mrf.mxu0
    %v342 = vadd.f32 0.0, %v341
    %343 = vmatprep.mubr.f32.mxu0 0.0
    %344 = vmatmul.mubr.f32.gmra.mxu0 %v67
    %v345 = vpop.f32.mrf.mxu0
    %v346 = vadd.f32 0.0, %v345
    %v347 = vpop.f32.mrf.mxu0
    %v348 = vadd.f32 0.0, %v347
    %349 = vdwg.mxu0
    %350 = vmatprep.subr.mxu0 %v193
    %351 = vmatpush1.msra.mxu0 %v192
    %352 = vmatprep.subr.mxu0 %v185
    %353 = vmatpush1.msra.mxu0 %v184
    %354 = vmatprep.subr.mxu0 %v177
    %355 = vmatpush1.msra.mxu0 %v176
    %356 = vmatprep.subr.mxu0 %v169
    %357 = vmatpush1.msra.mxu0 %v168
    %358 = vmatprep.subr.mxu0 %v161
    %359 = vmatpush1.msra.mxu0 %v160
    %360 = vmatprep.subr.mxu0 %v153
    %361 = vmatpush1.msra.mxu0 %v152
    %362 = vmatprep.subr.mxu0 %v145
    %363 = vmatpush1.msra.mxu0 %v144
    %364 = vmatprep.subr.mxu0 %v137
    %365 = vmatpush1.msra.mxu0 %v136
    %366 = vmatprep.subr.mxu0 %v129
    %367 = vmatpush1.msra.mxu0 %v128
    %368 = vmatprep.subr.mxu0 %v121
    %369 = vmatpush1.msra.mxu0 %v120
    %370 = vmatprep.subr.mxu0 %v113
    %371 = vmatpush1.msra.mxu0 %v112
    %372 = vmatprep.subr.mxu0 %v105
    %373 = vmatpush1.msra.mxu0 %v104
    %374 = vmatprep.subr.mxu0 %v97
    %375 = vmatpush1.msra.mxu0 %v96
    %376 = vmatprep.subr.mxu0 %v89
    %377 = vmatpush1.msra.mxu0 %v88
    %378 = vmatprep.subr.mxu0 %v81
    %379 = vmatpush1.msra.mxu0 %v80
    %380 = vmatprep.subr.mxu0 %v73
    %381 = vmatpush1.msra.mxu0 %v72
    %382 = vmatprep.subr.mxu0 0.0
    %383 = vmatpush2.msra.mxu0 0.0
    %384 = vmatprep.subr.mxu0 0.0
    %385 = vmatpush2.msra.mxu0 0.0
    %386 = vmatprep.subr.mxu0 0.0
    %387 = vmatpush2.msra.mxu0 0.0
    %388 = vmatprep.subr.mxu0 0.0
    %389 = vmatpush2.msra.mxu0 0.0
    %390 = vmatprep.subr.mxu0 0.0
    %391 = vmatpush2.msra.mxu0 0.0
    %392 = vmatprep.subr.mxu0 0.0
    %393 = vmatpush2.msra.mxu0 0.0
    %394 = vmatprep.subr.mxu0 0.0
    %395 = vmatpush2.msra.mxu0 0.0
    %396 = vmatprep.subr.mxu0 0.0
    %397 = vmatpush2.msra.mxu0 0.0
    %398 = vmatprep.subr.mxu0 0.0
    %399 = vmatpush2.msra.mxu0 0.0
    %400 = vmatprep.subr.mxu0 0.0
    %401 = vmatpush2.msra.mxu0 0.0
    %402 = vmatprep.subr.mxu0 0.0
    %403 = vmatpush2.msra.mxu0 0.0
    %404 = vmatprep.subr.mxu0 0.0
    %405 = vmatpush2.msra.mxu0 0.0
    %406 = vmatprep.subr.mxu0 0.0
    %407 = vmatpush2.msra.mxu0 0.0
    %408 = vmatprep.subr.mxu0 0.0
    %409 = vmatpush2.msra.mxu0 0.0
    %410 = vmatprep.subr.mxu0 0.0
    %411 = vmatpush2.msra.mxu0 0.0
    %412 = vmatprep.subr.mxu0 0.0
    %413 = vmatpush2.msra.mxu0 0.0
    %414 = vmatprep.mubr.f32.mxu0 0.0
    %415 = vmatmul.mubr.f32.gmra.mxu0 %v66
    %v416 = vpop.f32.mrf.mxu0
    %v417 = vadd.f32 0.0, %v416
    %v418 = vpop.f32.mrf.mxu0
    %v419 = vadd.f32 0.0, %v418
    %420 = vmatprep.mubr.f32.mxu0 0.0
    %421 = vmatmul.mubr.f32.gmra.mxu0 %v67
    %v422 = vpop.f32.mrf.mxu0
    %v423 = vadd.f32 0.0, %v422
    %v424 = vpop.f32.mrf.mxu0
    %v425 = vadd.f32 0.0, %v424
    %426 = vdwg.mxu0
    %427 = vmatprep.subr.mxu0 %v195
    %428 = vmatpush1.msra.mxu0 %v194
    %429 = vmatprep.subr.mxu0 %v187
    %430 = vmatpush1.msra.mxu0 %v186
    %431 = vmatprep.subr.mxu0 %v179
    %432 = vmatpush1.msra.mxu0 %v178
    %433 = vmatprep.subr.mxu0 %v171
    %434 = vmatpush1.msra.mxu0 %v170
    %435 = vmatprep.subr.mxu0 %v163
    %436 = vmatpush1.msra.mxu0 %v162
    %437 = vmatprep.subr.mxu0 %v155
    %438 = vmatpush1.msra.mxu0 %v154
    %439 = vmatprep.subr.mxu0 %v147
    %440 = vmatpush1.msra.mxu0 %v146
    %441 = vmatprep.subr.mxu0 %v139
    %442 = vmatpush1.msra.mxu0 %v138
    %443 = vmatprep.subr.mxu0 %v131
    %444 = vmatpush1.msra.mxu0 %v130
    %445 = vmatprep.subr.mxu0 %v123
    %446 = vmatpush1.msra.mxu0 %v122
    %447 = vmatprep.subr.mxu0 %v115
    %448 = vmatpush1.msra.mxu0 %v114
    %449 = vmatprep.subr.mxu0 %v107
    %450 = vmatpush1.msra.mxu0 %v106
    %451 = vmatprep.subr.mxu0 %v99
    %452 = vmatpush1.msra.mxu0 %v98
    %453 = vmatprep.subr.mxu0 %v91
    %454 = vmatpush1.msra.mxu0 %v90
    %455 = vmatprep.subr.mxu0 %v83
    %456 = vmatpush1.msra.mxu0 %v82
    %457 = vmatprep.subr.mxu0 %v75
    %458 = vmatpush1.msra.mxu0 %v74
    %459 = vmatprep.subr.mxu0 0.0
    %460 = vmatpush2.msra.mxu0 0.0
    %461 = vmatprep.subr.mxu0 0.0
    %462 = vmatpush2.msra.mxu0 0.0
    %463 = vmatprep.subr.mxu0 0.0
    %464 = vmatpush2.msra.mxu0 0.0
    %465 = vmatprep.subr.mxu0 0.0
    %466 = vmatpush2.msra.mxu0 0.0
    %467 = vmatprep.subr.mxu0 0.0
    %468 = vmatpush2.msra.mxu0 0.0
    %469 = vmatprep.subr.mxu0 0.0
    %470 = vmatpush2.msra.mxu0 0.0
    %471 = vmatprep.subr.mxu0 0.0
    %472 = vmatpush2.msra.mxu0 0.0
    %473 = vmatprep.subr.mxu0 0.0
    %474 = vmatpush2.msra.mxu0 0.0
    %475 = vmatprep.subr.mxu0 0.0
    %476 = vmatpush2.msra.mxu0 0.0
    %477 = vmatprep.subr.mxu0 0.0
    %478 = vmatpush2.msra.mxu0 0.0
    %479 = vmatprep.subr.mxu0 0.0
    %480 = vmatpush2.msra.mxu0 0.0
    %481 = vmatprep.subr.mxu0 0.0
    %482 = vmatpush2.msra.mxu0 0.0
    %483 = vmatprep.subr.mxu0 0.0
    %484 = vmatpush2.msra.mxu0 0.0
    %485 = vmatprep.subr.mxu0 0.0
    %486 = vmatpush2.msra.mxu0 0.0
    %487 = vmatprep.subr.mxu0 0.0
    %488 = vmatpush2.msra.mxu0 0.0
    %489 = vmatprep.subr.mxu0 0.0
    %490 = vmatpush2.msra.mxu0 0.0
    %491 = vmatprep.mubr.f32.mxu0 0.0
    %492 = vmatmul.mubr.f32.gmra.mxu0 %v66
    %v493 = vpop.f32.mrf.mxu0
    %v494 = vadd.f32 0.0, %v493
    %v495 = vpop.f32.mrf.mxu0
    %v496 = vadd.f32 0.0, %v495
    %497 = vmatprep.mubr.f32.mxu0 0.0
    %498 = vmatmul.mubr.f32.gmra.mxu0 %v67
    %v499 = vpop.f32.mrf.mxu0
    %v500 = vadd.f32 0.0, %v499
    %v501 = vpop.f32.mrf.mxu0
    %v502 = vadd.f32 0.0, %v501
    %503 = vdwg.mxu0
    %s504 = sld [smem:[#allocation3]]
    %v505 = vstv %s504
    %v506 = vmul.f32 %v263, %v505
    %v507 = vmul.f32 %v265, %v505
    %v508 = vmul.f32 %v340, %v505
    %v509 = vmul.f32 %v342, %v505
    %v510 = vmul.f32 %v269, %v505
    %v511 = vmul.f32 %v271, %v505
    %v512 = vmul.f32 %v346, %v505
    %v513 = vmul.f32 %v348, %v505
    %v514 = vxor.u32 %v506, 2147483648
    %v515 = vxor.u32 %v507, 2147483648
    %v516 = vxor.u32 %v508, 2147483648
    %v517 = vxor.u32 %v509, 2147483648
    %v518 = vxor.u32 %v510, 2147483648
    %v519 = vxor.u32 %v511, 2147483648
    %v520 = vxor.u32 %v512, 2147483648
    %v521 = vxor.u32 %v513, 2147483648
    %v522 = vmul.f32 %v514, 1.442695
    %v523 = vpow.pop %v522
    %v524 = vmul.f32 %v515, 1.442695
    %v525 = vpow.pop %v524
    %v526 = vmul.f32 %v516, 1.442695
    %v527 = vpow.pop %v526
    %v528 = vmul.f32 %v517, 1.442695
    %v529 = vpow.pop %v528
    %v530 = vmul.f32 %v518, 1.442695
    %v531 = vpow.pop %v530
    %v532 = vmul.f32 %v519, 1.442695
    %v533 = vpow.pop %v532
    %v534 = vmul.f32 %v520, 1.442695
    %v535 = vpow.pop %v534
    %v536 = vmul.f32 %v521, 1.442695
    %v537 = vpow.pop %v536
    %v538 = vadd.f32 %v523, 1.0
    %v539 = vadd.f32 %v525, 1.0
    %v540 = vadd.f32 %v527, 1.0
    %v541 = vadd.f32 %v529, 1.0
    %v542 = vadd.f32 %v531, 1.0
    %v543 = vadd.f32 %v533, 1.0
    %v544 = vadd.f32 %v535, 1.0
    %v545 = vadd.f32 %v537, 1.0
    %v546 = vrcp.pop %v538
    %v547 = vmul.f32 1.0, %v546
    %v548 = vrcp.pop %v539
    %v549 = vmul.f32 1.0, %v548
    %v550 = vrcp.pop %v540
    %v551 = vmul.f32 1.0, %v550
    %v552 = vrcp.pop %v541
    %v553 = vmul.f32 1.0, %v552
    %v554 = vrcp.pop %v542
    %v555 = vmul.f32 1.0, %v554
    %v556 = vrcp.pop %v543
    %v557 = vmul.f32 1.0, %v556
    %v558 = vrcp.pop %v544
    %v559 = vmul.f32 1.0, %v558
    %v560 = vrcp.pop %v545
    %v561 = vmul.f32 1.0, %v560
    %v562 = vmul.f32 %v263, %v547
    %v563 = vmul.f32 %v265, %v549
    %v564 = vmul.f32 %v340, %v551
    %v565 = vmul.f32 %v342, %v553
    %v566 = vmul.f32 %v269, %v555
    %v567 = vmul.f32 %v271, %v557
    %v568 = vmul.f32 %v346, %v559
    %v569 = vmul.f32 %v348, %v561
    %v570 = vmul.f32 %v562, %v417
    %v571 = vmul.f32 %v563, %v419
    %v572 = vmul.f32 %v564, %v494
    %v573 = vmul.f32 %v565, %v496
    %v574 = vmul.f32 %v566, %v423
    %v575 = vmul.f32 %v567, %v425
    %v576 = vmul.f32 %v568, %v500
    %v577 = vmul.f32 %v569, %v502
    %v578 = vld [vmem:[#allocation2] sm:$0xff]
    %v579 = vld [vmem:[#allocation2 + $0x8] sm:$0xff]
    %v580 = vld [vmem:[#allocation9] sm:$0xff]
    %v581 = vld [vmem:[#allocation9 + $0x8] sm:$0xff]
    %v582 = vld [vmem:[#allocation9 + $0x10] sm:$0xff]
    %v583 = vld [vmem:[#allocation9 + $0x18] sm:$0xff]
    %v584 = vld [vmem:[#allocation9 + $0x20] sm:$0xff]
    %v585 = vld [vmem:[#allocation9 + $0x28] sm:$0xff]
    %v586 = vld [vmem:[#allocation9 + $0x30] sm:$0xff]
    %v587 = vld [vmem:[#allocation9 + $0x38] sm:$0xff]
    %v588 = vld [vmem:[#allocation9 + $0x40] sm:$0xff]
    %v589 = vld [vmem:[#allocation9 + $0x48] sm:$0xff]
    %v590 = vld [vmem:[#allocation9 + $0x50] sm:$0xff]
    %v591 = vld [vmem:[#allocation9 + $0x58] sm:$0xff]
    %v592 = vld [vmem:[#allocation9 + $0x60] sm:$0xff]
    %v593 = vld [vmem:[#allocation9 + $0x68] sm:$0xff]
    %v594 = vld [vmem:[#allocation9 + $0x70] sm:$0xff]
    %v595 = vld [vmem:[#allocation9 + $0x78] sm:$0xff]
    %v596 = vld [vmem:[#allocation9 + $0x80] sm:$0xff]
    %v597 = vld [vmem:[#allocation9 + $0x88] sm:$0xff]
    %v598 = vld [vmem:[#allocation9 + $0x90] sm:$0xff]
    %v599 = vld [vmem:[#allocation9 + $0x98] sm:$0xff]
    %v600 = vld [vmem:[#allocation9 + $0xa0] sm:$0xff]
    %v601 = vld [vmem:[#allocation9 + $0xa8] sm:$0xff]
    %v602 = vld [vmem:[#allocation9 + $0xb0] sm:$0xff]
    %v603 = vld [vmem:[#allocation9 + $0xb8] sm:$0xff]
    %v604 = vld [vmem:[#allocation9 + $0xc0] sm:$0xff]
    %v605 = vld [vmem:[#allocation9 + $0xc8] sm:$0xff]
    %v606 = vld [vmem:[#allocation9 + $0xd0] sm:$0xff]
    %v607 = vld [vmem:[#allocation9 + $0xd8] sm:$0xff]
    %v608 = vld [vmem:[#allocation9 + $0xe0] sm:$0xff]
    %v609 = vld [vmem:[#allocation9 + $0xe8] sm:$0xff]
    %v610 = vld [vmem:[#allocation9 + $0xf0] sm:$0xff]
    %v611 = vld [vmem:[#allocation9 + $0xf8] sm:$0xff]
    %v612 = vld [vmem:[#allocation9 + $0x100] sm:$0xff]
    %v613 = vld [vmem:[#allocation9 + $0x108] sm:$0xff]
    %v614 = vld [vmem:[#allocation9 + $0x110] sm:$0xff]
    %v615 = vld [vmem:[#allocation9 + $0x118] sm:$0xff]
    %v616 = vld [vmem:[#allocation9 + $0x120] sm:$0xff]
    %v617 = vld [vmem:[#allocation9 + $0x128] sm:$0xff]
    %v618 = vld [vmem:[#allocation9 + $0x130] sm:$0xff]
    %v619 = vld [vmem:[#allocation9 + $0x138] sm:$0xff]
    %v620 = vld [vmem:[#allocation9 + $0x140] sm:$0xff]
    %v621 = vld [vmem:[#allocation9 + $0x148] sm:$0xff]
    %v622 = vld [vmem:[#allocation9 + $0x150] sm:$0xff]
    %v623 = vld [vmem:[#allocation9 + $0x158] sm:$0xff]
    %v624 = vld [vmem:[#allocation9 + $0x160] sm:$0xff]
    %v625 = vld [vmem:[#allocation9 + $0x168] sm:$0xff]
    %v626 = vld [vmem:[#allocation9 + $0x170] sm:$0xff]
    %v627 = vld [vmem:[#allocation9 + $0x178] sm:$0xff]
    %v628 = vld [vmem:[#allocation9 + $0x180] sm:$0xff]
    %v629 = vld [vmem:[#allocation9 + $0x188] sm:$0xff]
    %v630 = vld [vmem:[#allocation9 + $0x190] sm:$0xff]
    %v631 = vld [vmem:[#allocation9 + $0x198] sm:$0xff]
    %v632 = vld [vmem:[#allocation9 + $0x1a0] sm:$0xff]
    %v633 = vld [vmem:[#allocation9 + $0x1a8] sm:$0xff]
    %v634 = vld [vmem:[#allocation9 + $0x1b0] sm:$0xff]
    %v635 = vld [vmem:[#allocation9 + $0x1b8] sm:$0xff]
    %v636 = vld [vmem:[#allocation9 + $0x1c0] sm:$0xff]
    %v637 = vld [vmem:[#allocation9 + $0x1c8] sm:$0xff]
    %v638 = vld [vmem:[#allocation9 + $0x1d0] sm:$0xff]
    %v639 = vld [vmem:[#allocation9 + $0x1d8] sm:$0xff]
    %v640 = vld [vmem:[#allocation9 + $0x1e0] sm:$0xff]
    %v641 = vld [vmem:[#allocation9 + $0x1e8] sm:$0xff]
    %v642 = vld [vmem:[#allocation9 + $0x1f0] sm:$0xff]
    %v643 = vld [vmem:[#allocation9 + $0x1f8] sm:$0xff]
    %644 = vmatprep.subr.mxu0 0.0
    %645 = vmatpush1.msra.mxu0 %v595
    %646 = vmatprep.subr.mxu0 0.0
    %647 = vmatpush1.msra.mxu0 %v594
    %648 = vmatprep.subr.mxu0 0.0
    %649 = vmatpush1.msra.mxu0 %v593
    %650 = vmatprep.subr.mxu0 0.0
    %651 = vmatpush1.msra.mxu0 %v592
    %652 = vmatprep.subr.mxu0 0.0
    %653 = vmatpush1.msra.mxu0 %v591
    %654 = vmatprep.subr.mxu0 0.0
    %655 = vmatpush1.msra.mxu0 %v590
    %656 = vmatprep.subr.mxu0 0.0
    %657 = vmatpush1.msra.mxu0 %v589
    %658 = vmatprep.subr.mxu0 0.0
    %659 = vmatpush1.msra.mxu0 %v588
    %660 = vmatprep.subr.mxu0 0.0
    %661 = vmatpush1.msra.mxu0 %v587
    %662 = vmatprep.subr.mxu0 0.0
    %663 = vmatpush1.msra.mxu0 %v586
    %664 = vmatprep.subr.mxu0 0.0
    %665 = vmatpush1.msra.mxu0 %v585
    %666 = vmatprep.subr.mxu0 0.0
    %667 = vmatpush1.msra.mxu0 %v584
    %668 = vmatprep.subr.mxu0 0.0
    %669 = vmatpush1.msra.mxu0 %v583
    %670 = vmatprep.subr.mxu0 0.0
    %671 = vmatpush1.msra.mxu0 %v582
    %672 = vmatprep.subr.mxu0 0.0
    %673 = vmatpush1.msra.mxu0 %v581
    %674 = vmatprep.subr.mxu0 0.0
    %675 = vmatpush1.msra.mxu0 %v580
    %676 = vmatprep.subr.mxu0 0.0
    %677 = vmatpush2.msra.mxu0 %v611
    %678 = vmatprep.subr.mxu0 0.0
    %679 = vmatpush2.msra.mxu0 %v610
    %680 = vmatprep.subr.mxu0 0.0
    %681 = vmatpush2.msra.mxu0 %v609
    %682 = vmatprep.subr.mxu0 0.0
    %683 = vmatpush2.msra.mxu0 %v608
    %684 = vmatprep.subr.mxu0 0.0
    %685 = vmatpush2.msra.mxu0 %v607
    %686 = vmatprep.subr.mxu0 0.0
    %687 = vmatpush2.msra.mxu0 %v606
    %688 = vmatprep.subr.mxu0 0.0
    %689 = vmatpush2.msra.mxu0 %v605
    %690 = vmatprep.subr.mxu0 0.0
    %691 = vmatpush2.msra.mxu0 %v604
    %692 = vmatprep.subr.mxu0 0.0
    %693 = vmatpush2.msra.mxu0 %v603
    %694 = vmatprep.subr.mxu0 0.0
    %695 = vmatpush2.msra.mxu0 %v602
    %696 = vmatprep.subr.mxu0 0.0
    %697 = vmatpush2.msra.mxu0 %v601
    %698 = vmatprep.subr.mxu0 0.0
    %699 = vmatpush2.msra.mxu0 %v600
    %700 = vmatprep.subr.mxu0 0.0
    %701 = vmatpush2.msra.mxu0 %v599
    %702 = vmatprep.subr.mxu0 0.0
    %703 = vmatpush2.msra.mxu0 %v598
    %704 = vmatprep.subr.mxu0 0.0
    %705 = vmatpush2.msra.mxu0 %v597
    %706 = vmatprep.subr.mxu0 0.0
    %707 = vmatpush2.msra.mxu0 %v596
    %708 = vmatprep.mubr.f32.mxu0 %v571
    %709 = vmatmul.mubr.f32.gmra.mxu0 %v570
    %v710 = vpop.f32.mrf.mxu0
    %v711 = vadd.f32 0.0, %v710
    %v712 = vpop.f32.mrf.mxu0
    %713 = vmatprep.mubr.f32.mxu0 %v575
    %714 = vmatmul.mubr.f32.gmra.mxu0 %v574
    %v715 = vpop.f32.mrf.mxu0
    %v716 = vadd.f32 0.0, %v715
    %v717 = vpop.f32.mrf.mxu0
    %718 = vdwg.mxu0
    %719 = vmatprep.subr.mxu0 0.0
    %720 = vmatpush1.msra.mxu0 %v627
    %721 = vmatprep.subr.mxu0 0.0
    %722 = vmatpush1.msra.mxu0 %v626
    %723 = vmatprep.subr.mxu0 0.0
    %724 = vmatpush1.msra.mxu0 %v625
    %725 = vmatprep.subr.mxu0 0.0
    %726 = vmatpush1.msra.mxu0 %v624
    %727 = vmatprep.subr.mxu0 0.0
    %728 = vmatpush1.msra.mxu0 %v623
    %729 = vmatprep.subr.mxu0 0.0
    %730 = vmatpush1.msra.mxu0 %v622
    %731 = vmatprep.subr.mxu0 0.0
    %732 = vmatpush1.msra.mxu0 %v621
    %733 = vmatprep.subr.mxu0 0.0
    %734 = vmatpush1.msra.mxu0 %v620
    %735 = vmatprep.subr.mxu0 0.0
    %736 = vmatpush1.msra.mxu0 %v619
    %737 = vmatprep.subr.mxu0 0.0
    %738 = vmatpush1.msra.mxu0 %v618
    %739 = vmatprep.subr.mxu0 0.0
    %740 = vmatpush1.msra.mxu0 %v617
    %741 = vmatprep.subr.mxu0 0.0
    %742 = vmatpush1.msra.mxu0 %v616
    %743 = vmatprep.subr.mxu0 0.0
    %744 = vmatpush1.msra.mxu0 %v615
    %745 = vmatprep.subr.mxu0 0.0
    %746 = vmatpush1.msra.mxu0 %v614
    %747 = vmatprep.subr.mxu0 0.0
    %748 = vmatpush1.msra.mxu0 %v613
    %749 = vmatprep.subr.mxu0 0.0
    %750 = vmatpush1.msra.mxu0 %v612
    %751 = vmatprep.subr.mxu0 0.0
    %752 = vmatpush2.msra.mxu0 %v643
    %753 = vmatprep.subr.mxu0 0.0
    %754 = vmatpush2.msra.mxu0 %v642
    %755 = vmatprep.subr.mxu0 0.0
    %756 = vmatpush2.msra.mxu0 %v641
    %757 = vmatprep.subr.mxu0 0.0
    %758 = vmatpush2.msra.mxu0 %v640
    %759 = vmatprep.subr.mxu0 0.0
    %760 = vmatpush2.msra.mxu0 %v639
    %761 = vmatprep.subr.mxu0 0.0
    %762 = vmatpush2.msra.mxu0 %v638
    %763 = vmatprep.subr.mxu0 0.0
    %764 = vmatpush2.msra.mxu0 %v637
    %765 = vmatprep.subr.mxu0 0.0
    %766 = vmatpush2.msra.mxu0 %v636
    %767 = vmatprep.subr.mxu0 0.0
    %768 = vmatpush2.msra.mxu0 %v635
    %769 = vmatprep.subr.mxu0 0.0
    %770 = vmatpush2.msra.mxu0 %v634
    %771 = vmatprep.subr.mxu0 0.0
    %772 = vmatpush2.msra.mxu0 %v633
    %773 = vmatprep.subr.mxu0 0.0
    %774 = vmatpush2.msra.mxu0 %v632
    %775 = vmatprep.subr.mxu0 0.0
    %776 = vmatpush2.msra.mxu0 %v631
    %777 = vmatprep.subr.mxu0 0.0
    %778 = vmatpush2.msra.mxu0 %v630
    %779 = vmatprep.subr.mxu0 0.0
    %780 = vmatpush2.msra.mxu0 %v629
    %781 = vmatprep.subr.mxu0 0.0
    %782 = vmatpush2.msra.mxu0 %v628
    %783 = vmatprep.mubr.f32.mxu0 %v573
    %784 = vmatmul.mubr.f32.gmra.mxu0 %v572
    %v785 = vpop.f32.mrf.mxu0
    %v786 = vadd.f32 %v711, %v785
    %v787 = vpop.f32.mrf.mxu0
    %788 = vmatprep.mubr.f32.mxu0 %v577
    %789 = vmatmul.mubr.f32.gmra.mxu0 %v576
    %v790 = vpop.f32.mrf.mxu0
    %v791 = vadd.f32 %v716, %v790
    %v792 = vpop.f32.mrf.mxu0
    %793 = vdwg.mxu0
    %v794 = vadd.f32 %v578, %v786
    %v795 = vadd.f32 %v579, %v791
    %796 = vst [vmem:[#allocation2] sm:$0xff] %v794
    %797 = vst [vmem:[#allocation2 + $0x8] sm:$0xff] %v795
    // Predicated region
    $region34: #{tpu_custom_call.1} parent=1 // pred_check
      %p798 = pneg %p60
    $region35: #{tpu_custom_call.1} parent=1 // pred_check_branch
      %800 = sbr.rel (%p798) target = $region37
    $region36: #{tpu_custom_call.1} parent=1 // pred_region
      %v801 = vld [vmem:[#allocation2] sm:$0xff]
      %v802 = vld [vmem:[#allocation2 + $0x8] sm:$0xff]
      %803 = vst [vmem:[#allocation10] sm:$0xff] %v801
      %804 = vst [vmem:[#allocation10 + $0x8] sm:$0xff] %v802
    $region37: #{tpu_custom_call.1} parent=1 // pred_fallthru
      _
    // Predicated region
    $region38: #{tpu_custom_call.1} parent=1 // pred_check
      _
    $region39: #{tpu_custom_call.1} parent=1 // pred_check_branch
      %806 = sbr.rel (0) target = $region41
    $region40: #{tpu_custom_call.1} parent=1 // pred_region
      %s808 = ssub.s32 256, 256
      %809 = vsyncadd [#allocation6], %s808
      %s810 = sshll.u32 [#allocation10], 4
      %s811 = int_to_ptr.vmem [resolvable:$true] %s810
      %816 = dma.vmem_to_hbm [thread:$0]  %s811, 256, %s4, [#allocation6], 128, 128, 8
    $region41: #{tpu_custom_call.1} parent=1 // pred_fallthru
      _
    // Predicated region
    $region42: #{tpu_custom_call.1} parent=1 // pred_check
      _
    $region43: #{tpu_custom_call.1} parent=1 // pred_check_branch
      %818 = sbr.rel (0) target = $region45
    $region44: #{tpu_custom_call.1} parent=1 // pred_region
      %819 = dma.done [#allocation6], 256
    $region45: #{tpu_custom_call.1} parent=1 // pred_fallthru
      _
    %820 = vsyncpa [#allocation5], 1
    %821 = vsyncpa [#allocation8], 1
    %822 = vsyncpa [#allocation6], 1

</llo_original>
